<compile_context>
chip_gen: v7x
topology: tpu7x:2x2x1
jax: 0.10.0
libtpu: 0.0.40
codegen_flags: <defaults>
</compile_context>

<pallas_src>
import functools

import jax
import jax.numpy as jnp
from jax.experimental import pallas as pl
from jax.experimental.pallas import tpu as pltpu


# ---------------------------------------------------------------------------
# Single-step kernel (mirrors LSTM.forward: seq_len == 1)
# ---------------------------------------------------------------------------
def _lstm_step_kernel(x_ref, rec_ref, w_ih_ref, w_hh_ref, b_ref, rec_out_ref,
                      *, hidden):
    H = hidden
    x = x_ref[...].astype(jnp.float32)
    h = rec_ref[:, :H].astype(jnp.float32)
    c = rec_ref[:, H:].astype(jnp.float32)

    # Two MXU pushes instead of one push on a lane-concatenated [x | h]
    # operand: removes the in-kernel XLU lane-shift/select concat.
    gates = (
        jnp.dot(x, w_ih_ref[...], preferred_element_type=jnp.float32)
        + jnp.dot(h, w_hh_ref[...], preferred_element_type=jnp.float32)
        + b_ref[...]
    )

    # Whole-block activations (two full-width EUP passes over the 4H-wide gate
    # block — exactly one 128-lane vreg row when 4H == 128), then gate slices.
    sig = jax.nn.sigmoid(gates)
    tnh = jnp.tanh(gates)
    i_g = sig[:, 0 * H:1 * H]
    f_g = sig[:, 1 * H:2 * H]
    g_g = tnh[:, 2 * H:3 * H]
    o_g = sig[:, 3 * H:4 * H]

    c_new = f_g * c + i_g * g_g
    h_new = o_g * jnp.tanh(c_new)

    # Direct sub-stores: no (B, 2H) concat temp, and h_new is stored once.
    rec_out_ref[:, :H] = h_new.astype(rec_out_ref.dtype)
    rec_out_ref[:, H:] = c_new.astype(rec_out_ref.dtype)


def lstm_forward(x, recurrent_states, recurrent_state_masks, params):
    """Mirrors LSTM.forward: returns (output, new_recurrent_states).

    x:                     (batch, input_size)
    recurrent_states:      (batch, 2*hidden)   -- [h | c]
    recurrent_state_masks: unused (reference forward never applies it)
    """
    del recurrent_state_masks  # unused in the reference forward pass
    w_ih, w_hh, bias = params
    batch, input_size = x.shape
    hidden = recurrent_states.shape[1] // 2
    assert w_ih.shape == (input_size, 4 * hidden)
    assert w_hh.shape == (hidden, 4 * hidden)

    vmem = pl.BlockSpec(memory_space=pltpu.MemorySpace.VMEM)

    flops = 2 * batch * (input_size + hidden) * 4 * hidden + 10 * batch * hidden
    transcendentals = batch * (4 * hidden + 4 * hidden + hidden)
    bytes_accessed = 4 * (batch * input_size
                          + 2 * batch * 2 * hidden
                          + (input_size + hidden) * 4 * hidden
                          + 4 * hidden)

    new_rec = pl.pallas_call(
        functools.partial(_lstm_step_kernel, hidden=hidden),
        out_shape=jax.ShapeDtypeStruct((batch, 2 * hidden),
                                       recurrent_states.dtype),
        in_specs=[vmem, vmem, vmem, vmem, vmem],
        out_specs=vmem,
        # In-place recurrent-state update (donate the state at the jit
        # boundary in the RL step to make it truly copy-free).
        input_output_aliases={1: 0},
        cost_estimate=pl.CostEstimate(
            flops=flops,
            transcendentals=transcendentals,
            bytes_accessed=bytes_accessed),
    )(x, recurrent_states, w_ih, w_hh, bias)

    # The module's first return value (the LSTM output) is just new h; the
    # kernel stores it once and we expose it as a slice of new_rec.
    output = new_rec[:, :hidden]
    return output, new_rec


# ---------------------------------------------------------------------------
# Multi-step rollout kernel (amortized variant from the perf review):
# grid=(T,), h/c carried in f32 VMEM scratch, W_hh resident, x-projection
# precomputed in bulk wrapper-side so only h @ W_hh stays in the recurrence.
# ---------------------------------------------------------------------------
def _lstm_rollout_kernel(xproj_ref, rec_ref, w_hh_ref, out_ref, rec_out_ref,
                         h_sc, c_sc, *, hidden):
    H = hidden
    t = pl.program_id(0)

    @pl.when(t == 0)
    def _():
        rec = rec_ref[...].astype(jnp.float32)
        h_sc[...] = rec[:, :H]
        c_sc[...] = rec[:, H:]

    gates = xproj_ref[...] + jnp.dot(h_sc[...], w_hh_ref[...],
                                     preferred_element_type=jnp.float32)
    sig = jax.nn.sigmoid(gates)
    tnh = jnp.tanh(gates)
    i_g = sig[:, 0 * H:1 * H]
    f_g = sig[:, 1 * H:2 * H]
    g_g = tnh[:, 2 * H:3 * H]
    o_g = sig[:, 3 * H:4 * H]

    c_new = f_g * c_sc[...] + i_g * g_g
    h_new = o_g * jnp.tanh(c_new)

    # Carry the state in f32 VMEM scratch across the T axis (no low-precision
    # round-trip), per the review's correctness note.
    h_sc[...] = h_new
    c_sc[...] = c_new

    out_ref[...] = h_new.astype(out_ref.dtype)

    @pl.when(t == pl.num_programs(0) - 1)
    def _():
        rec_out_ref[:, :H] = h_new.astype(rec_out_ref.dtype)
        rec_out_ref[:, H:] = c_new.astype(rec_out_ref.dtype)


def lstm_rollout(xs, recurrent_states, params):
    """Runs T LSTM steps in one pallas_call.

    xs:               (T, batch, input_size)
    recurrent_states: (batch, 2*hidden)  -- initial [h | c]
    Returns (outputs (T, batch, hidden), final [h | c] (batch, 2*hidden)).
    """
    w_ih, w_hh, bias = params
    T, batch, input_size = xs.shape
    hidden = recurrent_states.shape[1] // 2

    # Bulk x-projection for all T steps as one large MXU-friendly matmul.
    xproj = (xs.reshape(T * batch, input_size).astype(jnp.float32) @ w_ih
             + bias).reshape(T, batch, 4 * hidden)

    grid_spec = pltpu.PrefetchScalarGridSpec(
        num_scalar_prefetch=0,
        grid=(T,),
        in_specs=[
            pl.BlockSpec((None, batch, 4 * hidden), lambda t: (t, 0, 0)),
            pl.BlockSpec((batch, 2 * hidden), lambda t: (0, 0)),   # resident
            pl.BlockSpec((hidden, 4 * hidden), lambda t: (0, 0)),  # resident
        ],
        out_specs=(
            pl.BlockSpec((None, batch, hidden), lambda t: (t, 0, 0)),
            pl.BlockSpec((batch, 2 * hidden), lambda t: (0, 0)),
        ),
        scratch_shapes=[
            pltpu.VMEM((batch, hidden), jnp.float32),  # h carry
            pltpu.VMEM((batch, hidden), jnp.float32),  # c carry
        ],
    )

    outs, final_rec = pl.pallas_call(
        functools.partial(_lstm_rollout_kernel, hidden=hidden),
        out_shape=(
            jax.ShapeDtypeStruct((T, batch, hidden), xs.dtype),
            jax.ShapeDtypeStruct((batch, 2 * hidden), recurrent_states.dtype),
        ),
        grid_spec=grid_spec,
        compiler_params=pltpu.CompilerParams(
            dimension_semantics=("arbitrary",)),
    )(xproj, recurrent_states, w_hh)
    return outs, final_rec


# ---------------------------------------------------------------------------
# Params / reference
# ---------------------------------------------------------------------------
def init_lstm_params(key, input_size, hidden):
    """nn.LSTM-style init: U(-1/sqrt(H), 1/sqrt(H)).

    Weights stored transposed vs. PyTorch:
      w_ih = weight_ih_l0^T  (input, 4*hidden)
      w_hh = weight_hh_l0^T  (hidden, 4*hidden)
      bias = bias_ih_l0 + bias_hh_l0  (1, 4*hidden), gate order [i, f, g, o].
    """
    k = 1.0 / jnp.sqrt(jnp.float32(hidden))
    k1, k2, k3, k4 = jax.random.split(key, 4)
    w_ih = jax.random.uniform(k1, (input_size, 4 * hidden), jnp.float32, -k, k)
    w_hh = jax.random.uniform(k2, (hidden, 4 * hidden), jnp.float32, -k, k)
    b_ih = jax.random.uniform(k3, (4 * hidden,), jnp.float32, -k, k)
    b_hh = jax.random.uniform(k4, (4 * hidden,), jnp.float32, -k, k)
    bias = (b_ih + b_hh).reshape(1, 4 * hidden)
    return w_ih, w_hh, bias


def _reference_step(x, recurrent_states, params):
    """Pure-JAX reference of a single nn.LSTM step (for verification)."""
    w_ih, w_hh, bias = params
    hidden = recurrent_states.shape[1] // 2
    h = recurrent_states[:, :hidden]
    c = recurrent_states[:, hidden:]
    gates = x @ w_ih + h @ w_hh + bias
    i = jax.nn.sigmoid(gates[:, 0 * hidden:1 * hidden])
    f = jax.nn.sigmoid(gates[:, 1 * hidden:2 * hidden])
    g = jnp.tanh(gates[:, 2 * hidden:3 * hidden])
    o = jax.nn.sigmoid(gates[:, 3 * hidden:4 * hidden])
    c_new = f * c + i * g
    h_new = o * jnp.tanh(c_new)
    return h_new, jnp.concatenate([h_new, c_new], axis=1)


if __name__ == "__main__":
    input_size = 16
    hidden = 32      # 4*hidden == 128 -> one lane-dense vreg for the gate block
    batch = 8        # multiple of 8 f32 sublanes (perf review)
    seq_len = 8

    key = jax.random.PRNGKey(0)
    kp, kx, kh, ks = jax.random.split(key, 4)

    params = init_lstm_params(kp, input_size, hidden)
    x = jax.random.normal(kx, (batch, input_size), jnp.float32)
    recurrent_states = jax.random.normal(kh, (batch, 2 * hidden), jnp.float32)
    recurrent_state_masks = jnp.ones((batch, 1), jnp.float32)  # unused, API parity
    xs = jax.random.normal(ks, (seq_len, batch, input_size), jnp.float32)

    # ---- pure-JAX references (computed first, before any aliasing kernels) ----
    ref_out, ref_rec = _reference_step(x, recurrent_states, params)
    r = recurrent_states
    ref_outs = []
    for t in range(seq_len):
        o, r = _reference_step(xs[t], r, params)
        ref_outs.append(o)
    ref_outs = jnp.stack(ref_outs, axis=0)
    ref_final = r

    # ---- single-step Pallas kernel (module forward) ----
    out, new_rec = lstm_forward(x, recurrent_states, recurrent_state_masks, params)
    out = jax.block_until_ready(out)
    new_rec = jax.block_until_ready(new_rec)
    assert out.shape == (batch, hidden)
    assert new_rec.shape == (batch, 2 * hidden)
    assert jnp.allclose(out, ref_out, atol=1e-5, rtol=1e-5)
    assert jnp.allclose(new_rec, ref_rec, atol=1e-5, rtol=1e-5)

    # ---- multi-step rollout kernel (amortized variant) ----
    outs, final_rec = lstm_rollout(xs, recurrent_states, params)
    outs = jax.block_until_ready(outs)
    final_rec = jax.block_until_ready(final_rec)
    assert outs.shape == (seq_len, batch, hidden)
    assert final_rec.shape == (batch, 2 * hidden)
    assert jnp.allclose(outs, ref_outs, atol=3e-5, rtol=1e-4)
    assert jnp.allclose(final_rec, ref_final, atol=3e-5, rtol=1e-4)

    print("KERNEL_OK")
</pallas_src>

<mosaic_0001>
module attributes {stable_mosaic.version = 11 : i64} {
  func.func @_lstm_step_kernel(%arg0: memref<8x16xf32, #tpu.memory_space<vmem>>, %arg1: memref<8x64xf32, #tpu.memory_space<vmem>>, %arg2: memref<16x128xf32, #tpu.memory_space<vmem>>, %arg3: memref<32x128xf32, #tpu.memory_space<vmem>>, %arg4: memref<1x128xf32, #tpu.memory_space<vmem>>, %arg5: memref<8x64xf32, #tpu.memory_space<vmem>>) attributes {dimension_semantics = [], scalar_prefetch = 0 : i64, scratch_operands = 0 : i64, tpu.core_type = #tpu.core_type<tc>} {
    %c0 = arith.constant 0 : index
    %c0_0 = arith.constant 0 : index
    %0 = vector.load %arg0[%c0, %c0_0] : memref<8x16xf32, #tpu.memory_space<vmem>>, vector<8x16xf32>
    %c0_1 = arith.constant 0 : index
    %c0_2 = arith.constant 0 : index
    %1 = vector.load %arg1[%c0_1, %c0_2] : memref<8x64xf32, #tpu.memory_space<vmem>>, vector<8x32xf32>
    %c0_3 = arith.constant 0 : index
    %c32 = arith.constant 32 : index
    %2 = vector.load %arg1[%c0_3, %c32] : memref<8x64xf32, #tpu.memory_space<vmem>>, vector<8x32xf32>
    %c0_4 = arith.constant 0 : index
    %c0_5 = arith.constant 0 : index
    %3 = vector.load %arg2[%c0_4, %c0_5] : memref<16x128xf32, #tpu.memory_space<vmem>>, vector<16x128xf32>
    %cst = arith.constant dense<0.000000e+00> : vector<8x128xf32>
    %4 = tpu.matmul %0, %3, %cst {dimension_numbers = #tpu.dot_dimension_numbers<[1], [0], [0], [1], [0, 0, 1, 1], [], []>} : vector<8x16xf32>, vector<16x128xf32>, vector<8x128xf32> -> vector<8x128xf32>
    %c0_6 = arith.constant 0 : index
    %c0_7 = arith.constant 0 : index
    %5 = vector.load %arg3[%c0_6, %c0_7] : memref<32x128xf32, #tpu.memory_space<vmem>>, vector<32x128xf32>
    %cst_8 = arith.constant dense<0.000000e+00> : vector<8x128xf32>
    %6 = tpu.matmul %1, %5, %cst_8 {dimension_numbers = #tpu.dot_dimension_numbers<[1], [0], [0], [1], [0, 0, 1, 1], [], []>} : vector<8x32xf32>, vector<32x128xf32>, vector<8x128xf32> -> vector<8x128xf32>
    %7 = arith.addf %4, %6 : vector<8x128xf32>
    %c0_9 = arith.constant 0 : index
    %c0_10 = arith.constant 0 : index
    %8 = vector.load %arg4[%c0_9, %c0_10] : memref<1x128xf32, #tpu.memory_space<vmem>>, vector<1x128xf32>
    %9 = vector.broadcast %8 : vector<1x128xf32> to vector<8x128xf32>
    %10 = arith.addf %7, %9 : vector<8x128xf32>
    %11 = arith.negf %10 : vector<8x128xf32>
    %12 = math.exp %11 : vector<8x128xf32>
    %cst_11 = arith.constant 1.000000e+00 : f32
    %13 = vector.broadcast %cst_11 : f32 to vector<8x128xf32>
    %14 = arith.addf %13, %12 : vector<8x128xf32>
    %15 = arith.divf %13, %14 : vector<8x128xf32>
    %16 = math.tanh %10 : vector<8x128xf32>
    %17 = vector.extract_strided_slice %15 {offsets = [0, 0], sizes = [8, 32], strides = [1, 1]} : vector<8x128xf32> to vector<8x32xf32>
    %18 = vector.extract_strided_slice %15 {offsets = [0, 32], sizes = [8, 32], strides = [1, 1]} : vector<8x128xf32> to vector<8x32xf32>
    %19 = vector.extract_strided_slice %16 {offsets = [0, 64], sizes = [8, 32], strides = [1, 1]} : vector<8x128xf32> to vector<8x32xf32>
    %20 = vector.extract_strided_slice %15 {offsets = [0, 96], sizes = [8, 32], strides = [1, 1]} : vector<8x128xf32> to vector<8x32xf32>
    %21 = arith.mulf %18, %2 : vector<8x32xf32>
    %22 = arith.mulf %17, %19 : vector<8x32xf32>
    %23 = arith.addf %21, %22 : vector<8x32xf32>
    %24 = math.tanh %23 : vector<8x32xf32>
    %25 = arith.mulf %20, %24 : vector<8x32xf32>
    %c0_12 = arith.constant 0 : index
    %c0_13 = arith.constant 0 : index
    %26 = vector.load %arg5[%c0_12, %c0_13] : memref<8x64xf32, #tpu.memory_space<vmem>>, vector<8x32xf32>
    tpu.vector_store %arg5[%c0_12, %c0_13], %25 {strides = array<i32>} : memref<8x64xf32, #tpu.memory_space<vmem>>, vector<8x32xf32>,
    %c0_14 = arith.constant 0 : index
    %c32_15 = arith.constant 32 : index
    %27 = vector.load %arg5[%c0_14, %c32_15] : memref<8x64xf32, #tpu.memory_space<vmem>>, vector<8x32xf32>
    tpu.vector_store %arg5[%c0_14, %c32_15], %23 {strides = array<i32>} : memref<8x64xf32, #tpu.memory_space<vmem>>, vector<8x32xf32>,
    return
  }
}

</mosaic_0001>

<llo_original>
// kernel: tpu_custom_call.1
$region0: #{tpu_custom_call.1}
  #allocation0 [shape = 'u32[]', space=smem, size = 0x4, offset = 0x4, fixed_abs, tag = 'smem constant byte address 0x4 - core index']
  #allocation1 [shape = 'u32[144,128]{1,0:T(1,128)}', space=vmem, size = 0x12000, scoped, tag = 'internal scratch']
  %s0 = inlined_call_operand.vmem [shape: f32[8,16], index: 0, kind: input, shape index: {}]
  %s1 = inlined_call_operand.hbm [shape: f32[8,64], index: 1, kind: input, shape index: {}, may-alias: {1,5}]
  %s2 = inlined_call_operand.vmem [shape: f32[16,128], index: 2, kind: input, shape index: {}]
  %s3 = inlined_call_operand.hbm [shape: f32[32,128], index: 3, kind: input, shape index: {}]
  %s4 = inlined_call_operand.vmem [shape: f32[1,128], index: 4, kind: input, shape index: {}]
  %s5 = inlined_call_operand.hbm [shape: f32[8,64], index: 5, kind: output, shape index: {}, may-alias: {1,5}]
  %s6 = sld [smem:[#allocation0]]
  $region38: #{tpu_custom_call.1} parent=0
    _
  %s8 = ssub.s32 1, %s6
  %s9 = scalar_select 0, %s8, %s6
  $region1: #{tpu_custom_call.1} parent=0
    #allocation2 [shape = 'u8[4096]{0}', space=vmem, size = 0x1000, scoped, tag = 'input window, operand 1, single buffered']
    #allocation3 [shape = 's32[1]{0}', space=sflag, size = 0x4, scoped, tag = 'scoped memory for tpu_custom_call.1']
    #allocation4 [shape = 's32[1]{0}', space=sflag, size = 0x4, scoped, tag = 'scoped memory for tpu_custom_call.1']
    #allocation5 [shape = 'u8[16384]{0}', space=vmem, size = 0x4000, scoped, tag = 'input window, operand 3, single buffered']
    #allocation6 [shape = 's32[1]{0}', space=sflag, size = 0x4, scoped, tag = 'scoped memory for tpu_custom_call.1']
    #allocation7 [shape = 'u8[4096]{0}', space=vmem, size = 0x1000, scoped, tag = 'output window, operand 0, single buffered']
    %10 = vsyncpa [#allocation3], 0
    %11 = vsyncpa [#allocation6], 0
    %12 = vsyncpa [#allocation4], 0
    // Predicated region
    $region2: #{tpu_custom_call.1} parent=1 // pred_check
      _
    $region3: #{tpu_custom_call.1} parent=1 // pred_check_branch
      %14 = sbr.rel (0) target = $region5
    $region4: #{tpu_custom_call.1} parent=1 // pred_region
      _
    $region5: #{tpu_custom_call.1} parent=1 // pred_fallthru
      _
    // Predicated region
    $region6: #{tpu_custom_call.1} parent=1 // pred_check
      _
    $region7: #{tpu_custom_call.1} parent=1 // pred_check_branch
      %16 = sbr.rel (0) target = $region9
    $region8: #{tpu_custom_call.1} parent=1 // pred_region
      %s18 = ssub.s32 128, 128
      %19 = vsyncadd [#allocation3], %s18
      %s21 = sshll.u32 [#allocation2], 4
      %s22 = int_to_ptr.vmem [resolvable:$true] %s21
      %24 = dma.hbm_to_vmem [thread:$0]  %s1, 128, %s22, [#allocation3]
    $region9: #{tpu_custom_call.1} parent=1 // pred_fallthru
      _
    // Predicated region
    $region10: #{tpu_custom_call.1} parent=1 // pred_check
      _
    $region11: #{tpu_custom_call.1} parent=1 // pred_check_branch
      %26 = sbr.rel (0) target = $region13
    $region12: #{tpu_custom_call.1} parent=1 // pred_region
      _
    $region13: #{tpu_custom_call.1} parent=1 // pred_fallthru
      _
    // Predicated region
    $region14: #{tpu_custom_call.1} parent=1 // pred_check
      _
    $region15: #{tpu_custom_call.1} parent=1 // pred_check_branch
      %28 = sbr.rel (0) target = $region17
    $region16: #{tpu_custom_call.1} parent=1 // pred_region
      %s30 = ssub.s32 512, 512
      %31 = vsyncadd [#allocation6], %s30
      %s32 = sshll.u32 [#allocation5], 4
      %s33 = int_to_ptr.vmem [resolvable:$true] %s32
      %38 = dma.hbm_to_vmem [thread:$0]  %s3, 512, %s33, [#allocation6], 128, 128, 8
    $region17: #{tpu_custom_call.1} parent=1 // pred_fallthru
      _
    // Predicated region
    $region18: #{tpu_custom_call.1} parent=1 // pred_check
      _
    $region19: #{tpu_custom_call.1} parent=1 // pred_check_branch
      %40 = sbr.rel (0) target = $region21
    $region20: #{tpu_custom_call.1} parent=1 // pred_region
      _
    $region21: #{tpu_custom_call.1} parent=1 // pred_fallthru
      _
    // Predicated region
    $region22: #{tpu_custom_call.1} parent=1 // pred_check
      _
    $region23: #{tpu_custom_call.1} parent=1 // pred_check_branch
      %42 = sbr.rel (0) target = $region25
    $region24: #{tpu_custom_call.1} parent=1 // pred_region
      %43 = dma.done [#allocation3], 128
    $region25: #{tpu_custom_call.1} parent=1 // pred_fallthru
      _
    // Predicated region
    $region26: #{tpu_custom_call.1} parent=1 // pred_check
      _
    $region27: #{tpu_custom_call.1} parent=1 // pred_check_branch
      %45 = sbr.rel (0) target = $region29
    $region28: #{tpu_custom_call.1} parent=1 // pred_region
      %46 = dma.done [#allocation6], 512
    $region29: #{tpu_custom_call.1} parent=1 // pred_fallthru
      _
    %v47 = vld [vmem:[%s0] sm:$0xff]
    %v48 = vld [vmem:[#allocation2] sm:$0xff]
    %v49 = vld [vmem:[%s2] sm:$0xff]
    %v50 = vld [vmem:[%s2 + $0x8] sm:$0xff]
    %v51 = vld [vmem:[#allocation5] sm:$0xff]
    %v52 = vld [vmem:[#allocation5 + $0x8] sm:$0xff]
    %v53 = vld [vmem:[#allocation5 + $0x10] sm:$0xff]
    %v54 = vld [vmem:[#allocation5 + $0x18] sm:$0xff]
    %vm55 = vcmask 261120
    %v57 = vsel %vm55, %v48, 0
    %59 = vmatprep.subr.mxu0 0.0
    %60 = vmatpush1.msra.mxu0 %v51
    %61 = vmatprep.subr.mxu0 0.0
    %62 = vmatpush1.msra.mxu0 %v52
    %63 = vmatprep.subr.mxu0 0.0
    %64 = vmatpush1.msra.mxu0 %v53
    %65 = vmatprep.subr.mxu0 0.0
    %66 = vmatpush1.msra.mxu0 %v54
    %67 = vmatprep.subr.mxu0 0.0
    %68 = vmatpush1.msra.mxu0 0.0
    %69 = vmatprep.subr.mxu0 0.0
    %70 = vmatpush1.msra.mxu0 0.0
    %71 = vmatprep.subr.mxu0 0.0
    %72 = vmatpush1.msra.mxu0 0.0
    %73 = vmatprep.subr.mxu0 0.0
    %74 = vmatpush1.msra.mxu0 0.0
    %75 = vmatprep.subr.mxu0 0.0
    %76 = vmatpush1.msra.mxu0 0.0
    %77 = vmatprep.subr.mxu0 0.0
    %78 = vmatpush1.msra.mxu0 0.0
    %79 = vmatprep.subr.mxu0 0.0
    %80 = vmatpush1.msra.mxu0 0.0
    %81 = vmatprep.subr.mxu0 0.0
    %82 = vmatpush1.msra.mxu0 0.0
    %83 = vmatprep.subr.mxu0 0.0
    %84 = vmatpush1.msra.mxu0 0.0
    %85 = vmatprep.subr.mxu0 0.0
    %86 = vmatpush1.msra.mxu0 0.0
    %87 = vmatprep.subr.mxu0 0.0
    %88 = vmatpush1.msra.mxu0 0.0
    %89 = vmatprep.subr.mxu0 0.0
    %90 = vmatpush1.msra.mxu0 0.0
    %91 = vmatprep.subr.mxu0 0.0
    %92 = vmatpush1.msra.mxu0 0.0
    %93 = vmatprep.subr.mxu0 0.0
    %94 = vmatpush1.msra.mxu0 0.0
    %95 = vmatprep.subr.mxu0 0.0
    %96 = vmatpush1.msra.mxu0 0.0
    %97 = vmatprep.subr.mxu0 0.0
    %98 = vmatpush1.msra.mxu0 0.0
    %99 = vmatprep.subr.mxu0 0.0
    %100 = vmatpush1.msra.mxu0 0.0
    %101 = vmatprep.subr.mxu0 0.0
    %102 = vmatpush1.msra.mxu0 0.0
    %103 = vmatprep.subr.mxu0 0.0
    %104 = vmatpush1.msra.mxu0 0.0
    %105 = vmatprep.subr.mxu0 0.0
    %106 = vmatpush1.msra.mxu0 0.0
    %107 = vmatprep.subr.mxu0 0.0
    %108 = vmatpush1.msra.mxu0 0.0
    %109 = vmatprep.subr.mxu0 0.0
    %110 = vmatpush1.msra.mxu0 0.0
    %111 = vmatprep.subr.mxu0 0.0
    %112 = vmatpush1.msra.mxu0 0.0
    %113 = vmatprep.subr.mxu0 0.0
    %114 = vmatpush1.msra.mxu0 0.0
    %115 = vmatprep.subr.mxu0 0.0
    %116 = vmatpush1.msra.mxu0 0.0
    %117 = vmatprep.subr.mxu0 0.0
    %118 = vmatpush1.msra.mxu0 0.0
    %119 = vmatprep.subr.mxu0 0.0
    %120 = vmatpush1.msra.mxu0 0.0
    %121 = vmatprep.subr.mxu0 0.0
    %122 = vmatpush1.msra.mxu0 0.0
    %123 = vmatprep.mubr.f32.mxu0 0.0
    %124 = vmatmul.mubr.f32.gmra.mrb[0].mxu0 %v57
    %v125 = vpop.f32.mrb[0].mxu0
    %v126 = vadd.f32 0.0, %v125
    %v127 = vpop.f32.mrb[0].mxu0
    %128 = vdwg.mxu0
    %vm129 = vcmask 130048
    %v131 = vsel %vm129, %v47, 0
    %133 = vmatprep.subr.mxu0 0.0
    %134 = vmatpush1.msra.mxu0 %v49
    %135 = vmatprep.subr.mxu0 0.0
    %136 = vmatpush1.msra.mxu0 %v50
    %137 = vmatprep.subr.mxu0 0.0
    %138 = vmatpush1.msra.mxu0 0.0
    %139 = vmatprep.subr.mxu0 0.0
    %140 = vmatpush1.msra.mxu0 0.0
    %141 = vmatprep.subr.mxu0 0.0
    %142 = vmatpush1.msra.mxu0 0.0
    %143 = vmatprep.subr.mxu0 0.0
    %144 = vmatpush1.msra.mxu0 0.0
    %145 = vmatprep.subr.mxu0 0.0
    %146 = vmatpush1.msra.mxu0 0.0
    %147 = vmatprep.subr.mxu0 0.0
    %148 = vmatpush1.msra.mxu0 0.0
    %149 = vmatprep.subr.mxu0 0.0
    %150 = vmatpush1.msra.mxu0 0.0
    %151 = vmatprep.subr.mxu0 0.0
    %152 = vmatpush1.msra.mxu0 0.0
    %153 = vmatprep.subr.mxu0 0.0
    %154 = vmatpush1.msra.mxu0 0.0
    %155 = vmatprep.subr.mxu0 0.0
    %156 = vmatpush1.msra.mxu0 0.0
    %157 = vmatprep.subr.mxu0 0.0
    %158 = vmatpush1.msra.mxu0 0.0
    %159 = vmatprep.subr.mxu0 0.0
    %160 = vmatpush1.msra.mxu0 0.0
    %161 = vmatprep.subr.mxu0 0.0
    %162 = vmatpush1.msra.mxu0 0.0
    %163 = vmatprep.subr.mxu0 0.0
    %164 = vmatpush1.msra.mxu0 0.0
    %165 = vmatprep.subr.mxu0 0.0
    %166 = vmatpush1.msra.mxu0 0.0
    %167 = vmatprep.subr.mxu0 0.0
    %168 = vmatpush1.msra.mxu0 0.0
    %169 = vmatprep.subr.mxu0 0.0
    %170 = vmatpush1.msra.mxu0 0.0
    %171 = vmatprep.subr.mxu0 0.0
    %172 = vmatpush1.msra.mxu0 0.0
    %173 = vmatprep.subr.mxu0 0.0
    %174 = vmatpush1.msra.mxu0 0.0
    %175 = vmatprep.subr.mxu0 0.0
    %176 = vmatpush1.msra.mxu0 0.0
    %177 = vmatprep.subr.mxu0 0.0
    %178 = vmatpush1.msra.mxu0 0.0
    %179 = vmatprep.subr.mxu0 0.0
    %180 = vmatpush1.msra.mxu0 0.0
    %181 = vmatprep.subr.mxu0 0.0
    %182 = vmatpush1.msra.mxu0 0.0
    %183 = vmatprep.subr.mxu0 0.0
    %184 = vmatpush1.msra.mxu0 0.0
    %185 = vmatprep.subr.mxu0 0.0
    %186 = vmatpush1.msra.mxu0 0.0
    %187 = vmatprep.subr.mxu0 0.0
    %188 = vmatpush1.msra.mxu0 0.0
    %189 = vmatprep.subr.mxu0 0.0
    %190 = vmatpush1.msra.mxu0 0.0
    %191 = vmatprep.subr.mxu0 0.0
    %192 = vmatpush1.msra.mxu0 0.0
    %193 = vmatprep.subr.mxu0 0.0
    %194 = vmatpush1.msra.mxu0 0.0
    %195 = vmatprep.subr.mxu0 0.0
    %196 = vmatpush1.msra.mxu0 0.0
    %197 = vmatprep.mubr.f32.mxu0 0.0
    %198 = vmatmul.mubr.f32.gmra.mrb[0].mxu0 %v131
    %v199 = vpop.f32.mrb[0].mxu0
    %v200 = vadd.f32 %v126, %v199
    %v201 = vpop.f32.mrb[0].mxu0
    %202 = vdwg.mxu0
    %v203 = vld [vmem:[%s4] sm:$0x1]
    %v205 = vlaneseq
    %v206 = vshrl.u32 %v205, 7
    %v207 = vsub.s32 0, %v206
    %v208 = vrot.slane %v203, %v207
    %v210 = vadd.f32 %v200, %v208
    %v211 = vxor.u32 %v210, 2147483648
    %v212 = vmul.f32 %v211, 1.442695
    %v213 = vpow.pop %v212
    %v214 = vadd.f32 %v213, 1.0
    %v215 = vrcp.pop %v214
    %v216 = vmul.f32 1.0, %v215
    %v217 = vtanh.pop %v210
    %v218 = vmul.f32 %v216, %v48
    %220 = vrot.lane.b32.xlu0 %v217, 64
    %v221 = vpop.permute.xlu0 %220
    %v223 = vmul.f32 %v216, %v221
    %225 = vrot.lane.b32.xlu0 %v223, 32
    %v226 = vpop.permute.xlu0 %225
    %v228 = vadd.f32 %v218, %v226
    %v229 = vtanh.pop %v228
    %231 = vrot.lane.b32.xlu0 %v229, 64
    %v232 = vpop.permute.xlu0 %231
    %v234 = vmul.f32 %v216, %v232
    %236 = vrot.lane.b32.xlu0 %v234, 32
    %v237 = vpop.permute.xlu0 %236
    %239 = vst.msk [vmem:[#allocation7] sm:$0xff] %vm55, %v237
    %vm240 = vcmask 523520
    %241 = vst.msk [vmem:[#allocation7] sm:$0xff] %vm240, %v228
    // Predicated region
    $region30: #{tpu_custom_call.1} parent=1 // pred_check
      _
    $region31: #{tpu_custom_call.1} parent=1 // pred_check_branch
      %243 = sbr.rel (0) target = $region33
    $region32: #{tpu_custom_call.1} parent=1 // pred_region
      %s245 = ssub.s32 128, 128
      %246 = vsyncadd [#allocation4], %s245
      %s248 = sshll.u32 [#allocation7], 4
      %s249 = int_to_ptr.vmem [resolvable:$true] %s248
      %251 = dma.vmem_to_hbm [thread:$0]  %s249, 128, %s5, [#allocation4]
    $region33: #{tpu_custom_call.1} parent=1 // pred_fallthru
      _
    // Predicated region
    $region34: #{tpu_custom_call.1} parent=1 // pred_check
      _
    $region35: #{tpu_custom_call.1} parent=1 // pred_check_branch
      %253 = sbr.rel (0) target = $region37
    $region36: #{tpu_custom_call.1} parent=1 // pred_region
      %254 = dma.done [#allocation4], 128
    $region37: #{tpu_custom_call.1} parent=1 // pred_fallthru
      _
    %255 = vsyncpa [#allocation3], 1
    %256 = vsyncpa [#allocation6], 1
    %257 = vsyncpa [#allocation4], 1

</llo_original>
